<compile_context>
chip_gen: v5e
topology: v5e:2x2
jax: 0.10.0
libtpu: 0.0.40
codegen_flags: <defaults>
</compile_context>

<pallas_src>
import jax
import jax.numpy as jnp
from jax.experimental import pallas as pl
from jax.experimental.pallas import tpu as pltpu

_LANE = 128      # vreg lane width  (last dim)
_SUBLANE = 8     # vreg sublane width (second-to-last dim)

# Flips to 2 if pl.Buffered(1) (single-buffered resident weights) is unsupported.
_WEIGHT_BUFFERS = [1]


def _round_up(n, m):
    return ((n + m - 1) // m) * m


def _feature_align():
    """256-alignment for large feature dims on v6e/v7x (2x256^2 MXU); 128 on v5e."""
    try:
        kind = jax.devices()[0].device_kind.lower()
        if "v5 lite" in kind or "v5e" in kind or "v5litepod" in kind:
            return 128
    except Exception:
        pass
    return 256


def _pad_feature(n, align):
    # Always at least one full 128-lane vreg; above that, round to `align`.
    return _round_up(n, _LANE) if n <= _LANE else _round_up(n, align)


def _vmem_limit_bytes():
    """Generation-aware VMEM limit with ~15% headroom for compiler scratch."""
    cap = 64 * 1024 * 1024  # conservative fallback: v7x per-TC VMEM
    try:
        cap = int(pltpu.get_tpu_info().vmem_capacity_bytes)
    except Exception:
        pass
    return int(cap * 0.85)   # ~54 MiB on v7x, ~108 MiB on v5e/v6e


def _pick_tile_b(B, Kp, Hp, Np, op_itemsize, block_b, vmem_limit, weight_buffers):
    """Largest multiple-of-8 batch tile that fits the VMEM budget after weights."""
    # Resident weights/biases (weight_buffers copies each; biases stay f32).
    weights = weight_buffers * ((Kp * Hp + Hp * Hp + Hp * Np) * op_itemsize
                                + (2 * Hp + Np) * 4)
    # Per batch-row working set: double-buffered x / out tiles + f32 intermediates
    # and their operand-dtype casts.
    per_row = (2 * Kp * op_itemsize        # x tile (2 pipeline buffers)
               + 2 * Np * 4                # out tile (2 pipeline buffers, f32)
               + 2 * Hp * (4 + op_itemsize)  # h1/h2 in f32 + operand-dtype copies
               + Np * 4)                   # pre-store f32 result
    budget = int(vmem_limit * 0.75) - weights
    fit = (budget // per_row) if budget > 0 else _SUBLANE
    fit = max(_SUBLANE, (fit // _SUBLANE) * _SUBLANE)
    return max(_SUBLANE, min(fit, block_b, _round_up(B, _SUBLANE)))


def _mlp_kernel(x_ref, w1_ref, b1_ref, w2_ref, b2_ref, w3_ref, b3_ref, o_ref):
    # One batch tile per grid step. Weights/biases stay VMEM-resident across all
    # batch tiles (constant index_maps, single-buffered when supported); the only
    # per-step DMA traffic is the x tile in and the out tile back, double-buffered
    # by the BlockSpec pipeline behind the matmuls.
    x = x_ref[...].astype(w1_ref.dtype)     # cast in-kernel (free on VPU)
    h1 = jnp.dot(x, w1_ref[...], preferred_element_type=jnp.float32) + b1_ref[...]
    h1 = jnp.maximum(h1, 0.0).astype(w2_ref.dtype)   # f32 epilogue, cast for MXU
    h2 = jnp.dot(h1, w2_ref[...], preferred_element_type=jnp.float32) + b2_ref[...]
    h2 = jnp.maximum(h2, 0.0).astype(w3_ref.dtype)
    y = jnp.dot(h2, w3_ref[...], preferred_element_type=jnp.float32) + b3_ref[...]
    o_ref[...] = y.astype(o_ref.dtype)


def prepare_params(params, *, compute_dtype=jnp.float32):
    """Pad + cast weights once (hoisted out of the per-call forward path).

    params: dict with w1 (in,hid), b1 (1,hid), w2 (hid,hid), b2 (1,hid),
            w3 (hid,out), b3 (1,out).
    """
    w1, b1 = params["w1"], params["b1"]
    w2, b2 = params["w2"], params["b2"]
    w3, b3 = params["w3"], params["b3"]
    K, H = w1.shape
    N = w3.shape[1]
    align = _feature_align()
    Kp, Hp, Np = (_pad_feature(d, align) for d in (K, H, N))

    def pad2(a, rows, cols, dtype):
        return jnp.pad(a, ((0, rows - a.shape[0]), (0, cols - a.shape[1]))).astype(dtype)

    return {
        "w1": pad2(w1, Kp, Hp, compute_dtype),
        "b1": pad2(b1, 1, Hp, jnp.float32),   # biases stay f32 (f32 epilogue)
        "w2": pad2(w2, Hp, Hp, compute_dtype),
        "b2": pad2(b2, 1, Hp, jnp.float32),
        "w3": pad2(w3, Hp, Np, compute_dtype),
        "b3": pad2(b3, 1, Np, jnp.float32),
        "dims": (K, H, N),
        "padded_dims": (Kp, Hp, Np),
        "compute_dtype": jnp.dtype(compute_dtype),
    }


def net_forward(x, prepared, *, block_b=1024):
    """Forward pass of Net as a single fused, batch-tiled Pallas kernel.

    x: (B, input_size) float32
    prepared: output of prepare_params() (weights already padded + cast).
    Returns (B, output_size) float32.
    """
    K, H, N = prepared["dims"]
    Kp, Hp, Np = prepared["padded_dims"]
    B = x.shape[0]
    assert x.shape == (B, K)
    op_itemsize = prepared["compute_dtype"].itemsize

    # Only the contraction (K) dim of x needs padding; the batch dim relies on
    # Pallas partial-tile handling (no wrapper batch pad / output row slice).
    xp = x if K == Kp else jnp.pad(x, ((0, 0), (0, Kp - K)))

    vmem_limit = _vmem_limit_bytes()
    tile_b = _pick_tile_b(B, Kp, Hp, Np, op_itemsize, block_b, vmem_limit,
                          _WEIGHT_BUFFERS[0])
    grid = (pl.cdiv(B, tile_b),)

    def run(weight_buffer_count):
        wkw = {"pipeline_mode": pl.Buffered(1)} if weight_buffer_count == 1 else {}
        in_specs = [
            pl.BlockSpec((tile_b, Kp), lambda i: (i, 0)),        # x: batch-tiled
            pl.BlockSpec((Kp, Hp), lambda i: (0, 0), **wkw),     # w1: resident
            pl.BlockSpec((1, Hp), lambda i: (0, 0), **wkw),      # b1: resident
            pl.BlockSpec((Hp, Hp), lambda i: (0, 0), **wkw),     # w2: resident
            pl.BlockSpec((1, Hp), lambda i: (0, 0), **wkw),      # b2: resident
            pl.BlockSpec((Hp, Np), lambda i: (0, 0), **wkw),     # w3: resident
            pl.BlockSpec((1, Np), lambda i: (0, 0), **wkw),      # b3: resident
        ]
        return pl.pallas_call(
            _mlp_kernel,
            out_shape=jax.ShapeDtypeStruct((B, Np), jnp.float32),
            grid_spec=pltpu.PrefetchScalarGridSpec(
                num_scalar_prefetch=0,
                grid=grid,
                in_specs=in_specs,
                out_specs=pl.BlockSpec((tile_b, Np), lambda i: (i, 0)),
            ),
            compiler_params=pltpu.CompilerParams(
                dimension_semantics=("parallel",),   # megacore-shard batch (v7x)
                vmem_limit_bytes=vmem_limit,
            ),
        )(xp, prepared["w1"], prepared["b1"], prepared["w2"], prepared["b2"],
          prepared["w3"], prepared["b3"])

    if _WEIGHT_BUFFERS[0] == 1:
        try:
            out_p = run(1)
            jax.block_until_ready(out_p)   # surface any lowering issue inside the try
        except Exception:
            _WEIGHT_BUFFERS[0] = 2         # Buffered(1) unsupported -> default buffering
            out_p = run(2)
    else:
        out_p = run(2)

    # Only the feature dim needs slicing back (lane-dense padded output slab).
    return out_p if Np == N else out_p[:, :N]


def init_params(key, input_size, output_size, hidden_size):
    """Deterministic synthetic init mirroring nn.Linear parameter shapes."""
    ks = jax.random.split(key, 6)

    # PyTorch Linear weight is (out, in); we store the transpose (in, out).
    def lin(kw, kb, fan_in, fan_out):
        bound = 1.0 / jnp.sqrt(fan_in)
        w = jax.random.uniform(kw, (fan_in, fan_out), jnp.float32, -bound, bound)
        b = jax.random.uniform(kb, (1, fan_out), jnp.float32, -bound, bound)
        return w, b

    w1, b1 = lin(ks[0], ks[1], input_size, hidden_size)
    w2, b2 = lin(ks[2], ks[3], hidden_size, hidden_size)
    w3, b3 = lin(ks[4], ks[5], hidden_size, output_size)
    return {"w1": w1, "b1": b1, "w2": w2, "b2": b2, "w3": w3, "b3": b3}


def net_forward_ref(x, p):
    h1 = jnp.maximum(x @ p["w1"] + p["b1"], 0.0)
    h2 = jnp.maximum(h1 @ p["w2"] + p["b2"], 0.0)
    return h2 @ p["w3"] + p["b3"]


# TODO(synk): the module's train()/evaluate() (MSELoss + Adam backward step) are
# host-side training utilities and are not translated to Pallas.

if __name__ == "__main__":
    key = jax.random.PRNGKey(0)
    k_x, k_p, k_xl = jax.random.split(key, 3)

    batch, input_size, hidden_size, output_size = 8, 16, 32, 8
    x = jax.random.normal(k_x, (batch, input_size), jnp.float32)
    params = init_params(k_p, input_size, output_size, hidden_size)
    ref = net_forward_ref(x, params)

    # 1) f32 operand path: exact parity with the reference.
    prep_f32 = prepare_params(params)                       # weights padded/cast once
    out_f32 = jax.block_until_ready(net_forward(x, prep_f32))
    assert out_f32.shape == (batch, output_size)
    assert jnp.allclose(out_f32, ref, atol=1e-5, rtol=1e-5)

    # 2) bf16 operand / f32 accumulate path (fast MXU config on v6e/v7x).
    prep_bf16 = prepare_params(params, compute_dtype=jnp.bfloat16)
    out_bf16 = jax.block_until_ready(net_forward(x, prep_bf16))
    assert out_bf16.shape == (batch, output_size)
    assert jnp.allclose(out_bf16, ref, atol=5e-2, rtol=5e-2)

    # 3) Multi-tile batch grid with a partial last tile (no batch padding):
    #    B=300, tile 128 -> grid of 3, last tile only 44 real rows.
    big_batch = 300
    xl = jax.random.normal(k_xl, (big_batch, input_size), jnp.float32)
    out_big = jax.block_until_ready(net_forward(xl, prep_f32, block_b=128))
    ref_big = net_forward_ref(xl, params)
    assert out_big.shape == (big_batch, output_size)
    assert jnp.allclose(out_big, ref_big, atol=1e-5, rtol=1e-5)

    print("KERNEL_OK")
</pallas_src>

<mosaic_0001>
module attributes {stable_mosaic.version = 11 : i64} {
  func.func @_mlp_kernel(%arg0: i32, %arg1: memref<8x128xf32, #tpu.memory_space<vmem>>, %arg2: memref<128x128xf32, #tpu.memory_space<vmem>>, %arg3: memref<1x128xf32, #tpu.memory_space<vmem>>, %arg4: memref<128x128xf32, #tpu.memory_space<vmem>>, %arg5: memref<1x128xf32, #tpu.memory_space<vmem>>, %arg6: memref<128x128xf32, #tpu.memory_space<vmem>>, %arg7: memref<1x128xf32, #tpu.memory_space<vmem>>, %arg8: memref<8x128xf32, #tpu.memory_space<vmem>>) attributes {dimension_semantics = [#tpu.dimension_semantics<parallel>], iteration_bounds = array<i64: 1>, scalar_prefetch = 0 : i64, scratch_operands = 0 : i64, tpu.core_type = #tpu.core_type<tc>, window_params = [{transform_indices = @transform_0, window_bounds = array<i64: 8, 128>}, {pipeline_mode = #tpu.pipeline_mode<synchronous>, transform_indices = @transform_1, window_bounds = array<i64: 128, 128>}, {pipeline_mode = #tpu.pipeline_mode<synchronous>, transform_indices = @transform_2, window_bounds = array<i64: 1, 128>}, {pipeline_mode = #tpu.pipeline_mode<synchronous>, transform_indices = @transform_3, window_bounds = array<i64: 128, 128>}, {pipeline_mode = #tpu.pipeline_mode<synchronous>, transform_indices = @transform_4, window_bounds = array<i64: 1, 128>}, {pipeline_mode = #tpu.pipeline_mode<synchronous>, transform_indices = @transform_5, window_bounds = array<i64: 128, 128>}, {pipeline_mode = #tpu.pipeline_mode<synchronous>, transform_indices = @transform_6, window_bounds = array<i64: 1, 128>}, {transform_indices = @transform_7, window_bounds = array<i64: 8, 128>}]} {
    %c0 = arith.constant 0 : index
    %c0_0 = arith.constant 0 : index
    %0 = vector.load %arg1[%c0, %c0_0] : memref<8x128xf32, #tpu.memory_space<vmem>>, vector<8x128xf32>
    %c0_1 = arith.constant 0 : index
    %c0_2 = arith.constant 0 : index
    %1 = vector.load %arg2[%c0_1, %c0_2] : memref<128x128xf32, #tpu.memory_space<vmem>>, vector<128x128xf32>
    %cst = arith.constant dense<0.000000e+00> : vector<8x128xf32>
    %2 = tpu.matmul %0, %1, %cst {dimension_numbers = #tpu.dot_dimension_numbers<[1], [0], [0], [1], [0, 0, 1, 1], [], []>} : vector<8x128xf32>, vector<128x128xf32>, vector<8x128xf32> -> vector<8x128xf32>
    %c0_3 = arith.constant 0 : index
    %c0_4 = arith.constant 0 : index
    %3 = vector.load %arg3[%c0_3, %c0_4] : memref<1x128xf32, #tpu.memory_space<vmem>>, vector<1x128xf32>
    %4 = vector.broadcast %3 : vector<1x128xf32> to vector<8x128xf32>
    %5 = arith.addf %2, %4 : vector<8x128xf32>
    %cst_5 = arith.constant 0.000000e+00 : f32
    %6 = vector.broadcast %cst_5 : f32 to vector<8x128xf32>
    %7 = arith.maximumf %5, %6 : vector<8x128xf32>
    %c0_6 = arith.constant 0 : index
    %c0_7 = arith.constant 0 : index
    %8 = vector.load %arg4[%c0_6, %c0_7] : memref<128x128xf32, #tpu.memory_space<vmem>>, vector<128x128xf32>
    %cst_8 = arith.constant dense<0.000000e+00> : vector<8x128xf32>
    %9 = tpu.matmul %7, %8, %cst_8 {dimension_numbers = #tpu.dot_dimension_numbers<[1], [0], [0], [1], [0, 0, 1, 1], [], []>} : vector<8x128xf32>, vector<128x128xf32>, vector<8x128xf32> -> vector<8x128xf32>
    %c0_9 = arith.constant 0 : index
    %c0_10 = arith.constant 0 : index
    %10 = vector.load %arg5[%c0_9, %c0_10] : memref<1x128xf32, #tpu.memory_space<vmem>>, vector<1x128xf32>
    %11 = vector.broadcast %10 : vector<1x128xf32> to vector<8x128xf32>
    %12 = arith.addf %9, %11 : vector<8x128xf32>
    %cst_11 = arith.constant 0.000000e+00 : f32
    %13 = vector.broadcast %cst_11 : f32 to vector<8x128xf32>
    %14 = arith.maximumf %12, %13 : vector<8x128xf32>
    %c0_12 = arith.constant 0 : index
    %c0_13 = arith.constant 0 : index
    %15 = vector.load %arg6[%c0_12, %c0_13] : memref<128x128xf32, #tpu.memory_space<vmem>>, vector<128x128xf32>
    %cst_14 = arith.constant dense<0.000000e+00> : vector<8x128xf32>
    %16 = tpu.matmul %14, %15, %cst_14 {dimension_numbers = #tpu.dot_dimension_numbers<[1], [0], [0], [1], [0, 0, 1, 1], [], []>} : vector<8x128xf32>, vector<128x128xf32>, vector<8x128xf32> -> vector<8x128xf32>
    %c0_15 = arith.constant 0 : index
    %c0_16 = arith.constant 0 : index
    %17 = vector.load %arg7[%c0_15, %c0_16] : memref<1x128xf32, #tpu.memory_space<vmem>>, vector<1x128xf32>
    %18 = vector.broadcast %17 : vector<1x128xf32> to vector<8x128xf32>
    %19 = arith.addf %16, %18 : vector<8x128xf32>
    %c0_17 = arith.constant 0 : index
    %c0_18 = arith.constant 0 : index
    %20 = vector.load %arg8[%c0_17, %c0_18] : memref<8x128xf32, #tpu.memory_space<vmem>>, vector<8x128xf32>
    tpu.vector_store %arg8[%c0_17, %c0_18], %19 {strides = array<i32>} : memref<8x128xf32, #tpu.memory_space<vmem>>, vector<8x128xf32>,
    return
  }
  func.func @transform_0(%arg0: i32) -> (i32, i32) {
    %c0_i32 = arith.constant 0 : i32
    %c0_i32_0 = arith.constant 0 : i32
    return %arg0, %c0_i32 : i32, i32
  }
  func.func @transform_1(%arg0: i32) -> (i32, i32) {
    %c0_i32 = arith.constant 0 : i32
    %c0_i32_0 = arith.constant 0 : i32
    %c0_i32_1 = arith.constant 0 : i32
    return %c0_i32, %c0_i32_0 : i32, i32
  }
  func.func @transform_2(%arg0: i32) -> (i32, i32) {
    %c0_i32 = arith.constant 0 : i32
    %c0_i32_0 = arith.constant 0 : i32
    %c0_i32_1 = arith.constant 0 : i32
    return %c0_i32, %c0_i32_0 : i32, i32
  }
  func.func @transform_3(%arg0: i32) -> (i32, i32) {
    %c0_i32 = arith.constant 0 : i32
    %c0_i32_0 = arith.constant 0 : i32
    %c0_i32_1 = arith.constant 0 : i32
    return %c0_i32, %c0_i32_0 : i32, i32
  }
  func.func @transform_4(%arg0: i32) -> (i32, i32) {
    %c0_i32 = arith.constant 0 : i32
    %c0_i32_0 = arith.constant 0 : i32
    %c0_i32_1 = arith.constant 0 : i32
    return %c0_i32, %c0_i32_0 : i32, i32
  }
  func.func @transform_5(%arg0: i32) -> (i32, i32) {
    %c0_i32 = arith.constant 0 : i32
    %c0_i32_0 = arith.constant 0 : i32
    %c0_i32_1 = arith.constant 0 : i32
    return %c0_i32, %c0_i32_0 : i32, i32
  }
  func.func @transform_6(%arg0: i32) -> (i32, i32) {
    %c0_i32 = arith.constant 0 : i32
    %c0_i32_0 = arith.constant 0 : i32
    %c0_i32_1 = arith.constant 0 : i32
    return %c0_i32, %c0_i32_0 : i32, i32
  }
  func.func @transform_7(%arg0: i32) -> (i32, i32) {
    %c0_i32 = arith.constant 0 : i32
    %c0_i32_0 = arith.constant 0 : i32
    return %arg0, %c0_i32 : i32, i32
  }
}

module attributes {stable_mosaic.version = 11 : i64} {
  func.func @_mlp_kernel(%arg0: i32, %arg1: memref<8x128xf32, #tpu.memory_space<vmem>>, %arg2: memref<128x128xf32, #tpu.memory_space<vmem>>, %arg3: memref<1x128xf32, #tpu.memory_space<vmem>>, %arg4: memref<128x128xf32, #tpu.memory_space<vmem>>, %arg5: memref<1x128xf32, #tpu.memory_space<vmem>>, %arg6: memref<128x128xf32, #tpu.memory_space<vmem>>, %arg7: memref<1x128xf32, #tpu.memory_space<vmem>>, %arg8: memref<8x128xf32, #tpu.memory_space<vmem>>) attributes {dimension_semantics = [#tpu.dimension_semantics<parallel>], iteration_bounds = array<i64: 1>, scalar_prefetch = 0 : i64, scratch_operands = 0 : i64, tpu.core_type = #tpu.core_type<tc>, window_params = [{transform_indices = @transform_0, window_bounds = array<i64: 8, 128>}, {pipeline_mode = #tpu.pipeline_mode<synchronous>, transform_indices = @transform_1, window_bounds = array<i64: 128, 128>}, {pipeline_mode = #tpu.pipeline_mode<synchronous>, transform_indices = @transform_2, window_bounds = array<i64: 1, 128>}, {pipeline_mode = #tpu.pipeline_mode<synchronous>, transform_indices = @transform_3, window_bounds = array<i64: 128, 128>}, {pipeline_mode = #tpu.pipeline_mode<synchronous>, transform_indices = @transform_4, window_bounds = array<i64: 1, 128>}, {pipeline_mode = #tpu.pipeline_mode<synchronous>, transform_indices = @transform_5, window_bounds = array<i64: 128, 128>}, {pipeline_mode = #tpu.pipeline_mode<synchronous>, transform_indices = @transform_6, window_bounds = array<i64: 1, 128>}, {transform_indices = @transform_7, window_bounds = array<i64: 8, 128>}]} {
    %c0 = arith.constant 0 : index
    %c0_0 = arith.constant 0 : index
    %0 = vector.load %arg1[%c0, %c0_0] : memref<8x128xf32, #tpu.memory_space<vmem>>, vector<8x128xf32>
    %c0_1 = arith.constant 0 : index
    %c0_2 = arith.constant 0 : index
    %1 = vector.load %arg2[%c0_1, %c0_2] : memref<128x128xf32, #tpu.memory_space<vmem>>, vector<128x128xf32>
    %cst = arith.constant dense<0.000000e+00> : vector<8x128xf32>
    %2 = tpu.matmul %0, %1, %cst {dimension_numbers = #tpu.dot_dimension_numbers<[1], [0], [0], [1], [0, 0, 1, 1], [], []>} : vector<8x128xf32>, vector<128x128xf32>, vector<8x128xf32> -> vector<8x128xf32>
    %c0_3 = arith.constant 0 : index
    %c0_4 = arith.constant 0 : index
    %3 = vector.load %arg3[%c0_3, %c0_4] : memref<1x128xf32, #tpu.memory_space<vmem>>, vector<1x128xf32>
    %4 = vector.broadcast %3 : vector<1x128xf32> to vector<8x128xf32>
    %5 = arith.addf %2, %4 : vector<8x128xf32>
    %cst_5 = arith.constant 0.000000e+00 : f32
    %6 = vector.broadcast %cst_5 : f32 to vector<8x128xf32>
    %7 = arith.maximumf %5, %6 : vector<8x128xf32>
    %c0_6 = arith.constant 0 : index
    %c0_7 = arith.constant 0 : index
    %8 = vector.load %arg4[%c0_6, %c0_7] : memref<128x128xf32, #tpu.memory_space<vmem>>, vector<128x128xf32>
    %cst_8 = arith.constant dense<0.000000e+00> : vector<8x128xf32>
    %9 = tpu.matmul %7, %8, %cst_8 {dimension_numbers = #tpu.dot_dimension_numbers<[1], [0], [0], [1], [0, 0, 1, 1], [], []>} : vector<8x128xf32>, vector<128x128xf32>, vector<8x128xf32> -> vector<8x128xf32>
    %c0_9 = arith.constant 0 : index
    %c0_10 = arith.constant 0 : index
    %10 = vector.load %arg5[%c0_9, %c0_10] : memref<1x128xf32, #tpu.memory_space<vmem>>, vector<1x128xf32>
    %11 = vector.broadcast %10 : vector<1x128xf32> to vector<8x128xf32>
    %12 = arith.addf %9, %11 : vector<8x128xf32>
    %cst_11 = arith.constant 0.000000e+00 : f32
    %13 = vector.broadcast %cst_11 : f32 to vector<8x128xf32>
    %14 = arith.maximumf %12, %13 : vector<8x128xf32>
    %c0_12 = arith.constant 0 : index
    %c0_13 = arith.constant 0 : index
    %15 = vector.load %arg6[%c0_12, %c0_13] : memref<128x128xf32, #tpu.memory_space<vmem>>, vector<128x128xf32>
    %cst_14 = arith.constant dense<0.000000e+00> : vector<8x128xf32>
    %16 = tpu.matmul %14, %15, %cst_14 {dimension_numbers = #tpu.dot_dimension_numbers<[1], [0], [0], [1], [0, 0, 1, 1], [], []>} : vector<8x128xf32>, vector<128x128xf32>, vector<8x128xf32> -> vector<8x128xf32>
    %c0_15 = arith.constant 0 : index
    %c0_16 = arith.constant 0 : index
    %17 = vector.load %arg7[%c0_15, %c0_16] : memref<1x128xf32, #tpu.memory_space<vmem>>, vector<1x128xf32>
    %18 = vector.broadcast %17 : vector<1x128xf32> to vector<8x128xf32>
    %19 = arith.addf %16, %18 : vector<8x128xf32>
    %c0_17 = arith.constant 0 : index
    %c0_18 = arith.constant 0 : index
    %20 = vector.load %arg8[%c0_17, %c0_18] : memref<8x128xf32, #tpu.memory_space<vmem>>, vector<8x128xf32>
    tpu.vector_store %arg8[%c0_17, %c0_18], %19 {strides = array<i32>} : memref<8x128xf32, #tpu.memory_space<vmem>>, vector<8x128xf32>,
    return
  }
  func.func @transform_0(%arg0: i32) -> (i32, i32) {
    %c0_i32 = arith.constant 0 : i32
    %c0_i32_0 = arith.constant 0 : i32
    return %arg0, %c0_i32 : i32, i32
  }
  func.func @transform_1(%arg0: i32) -> (i32, i32) {
    %c0_i32 = arith.constant 0 : i32
    %c0_i32_0 = arith.constant 0 : i32
    %c0_i32_1 = arith.constant 0 : i32
    return %c0_i32, %c0_i32_0 : i32, i32
  }
  func.func @transform_2(%arg0: i32) -> (i32, i32) {
    %c0_i32 = arith.constant 0 : i32
    %c0_i32_0 = arith.constant 0 : i32
    %c0_i32_1 = arith.constant 0 : i32
    return %c0_i32, %c0_i32_0 : i32, i32
  }
  func.func @transform_3(%arg0: i32) -> (i32, i32) {
    %c0_i32 = arith.constant 0 : i32
    %c0_i32_0 = arith.constant 0 : i32
    %c0_i32_1 = arith.constant 0 : i32
    return %c0_i32, %c0_i32_0 : i32, i32
  }
  func.func @transform_4(%arg0: i32) -> (i32, i32) {
    %c0_i32 = arith.constant 0 : i32
    %c0_i32_0 = arith.constant 0 : i32
    %c0_i32_1 = arith.constant 0 : i32
    return %c0_i32, %c0_i32_0 : i32, i32
  }
  func.func @transform_5(%arg0: i32) -> (i32, i32) {
    %c0_i32 = arith.constant 0 : i32
    %c0_i32_0 = arith.constant 0 : i32
    %c0_i32_1 = arith.constant 0 : i32
    return %c0_i32, %c0_i32_0 : i32, i32
  }
  func.func @transform_6(%arg0: i32) -> (i32, i32) {
    %c0_i32 = arith.constant 0 : i32
    %c0_i32_0 = arith.constant 0 : i32
    %c0_i32_1 = arith.constant 0 : i32
    return %c0_i32, %c0_i32_0 : i32, i32
  }
  func.func @transform_7(%arg0: i32) -> (i32, i32) {
    %c0_i32 = arith.constant 0 : i32
    %c0_i32_0 = arith.constant 0 : i32
    return %arg0, %c0_i32 : i32, i32
  }
}

</mosaic_0001>

<llo_original>
// kernel: tpu_custom_call.1
$region0: #{tpu_custom_call.1}
  #allocation0 [shape = 'u32[]', space=smem, size = 0x4, offset = 0x4, fixed_abs, tag = 'smem constant byte address 0x4 - core index']
  #allocation1 [shape = 'u32[72,128]{1,0:T(1,128)}', space=vmem, size = 0x9000, scoped, tag = 'internal scratch']
  %s0 = inlined_call_operand.hbm [shape: f32[8,128], index: 0, kind: input, shape index: {}]
  %s1 = inlined_call_operand.hbm [shape: f32[128,128], index: 1, kind: input, shape index: {}]
  %s2 = inlined_call_operand.vmem [shape: f32[1,128], index: 2, kind: input, shape index: {}]
  %s3 = inlined_call_operand.hbm [shape: f32[128,128], index: 3, kind: input, shape index: {}]
  %s4 = inlined_call_operand.vmem [shape: f32[1,128], index: 4, kind: input, shape index: {}]
  %s5 = inlined_call_operand.hbm [shape: f32[128,128], index: 5, kind: input, shape index: {}]
  %s6 = inlined_call_operand.vmem [shape: f32[1,128], index: 6, kind: input, shape index: {}]
  %s7 = inlined_call_operand.hbm [shape: f32[8,128], index: 7, kind: output, shape index: {}]
  %s8 = sld [smem:[#allocation0]]
  $region54: #{tpu_custom_call.1} parent=0
    _
  %s10 = ssub.s32 1, %s8
  %s11 = scalar_select 0, %s10, %s8
  $region1: #{tpu_custom_call.1} parent=0
    #allocation2 [shape = 'u8[4096]{0}', space=vmem, size = 0x1000, scoped, tag = 'input window, operand 0, single buffered']
    #allocation3 [shape = 's32[1]{0}', space=sflag, size = 0x4, scoped, tag = 'scoped memory for tpu_custom_call.1']
    #allocation4 [shape = 's32[1]{0}', space=sflag, size = 0x4, scoped, tag = 'scoped memory for tpu_custom_call.1']
    #allocation5 [shape = 'u8[65536]{0}', space=vmem, size = 0x10000, scoped, tag = 'input window, operand 1, single buffered']
    #allocation6 [shape = 's32[1]{0}', space=sflag, size = 0x4, scoped, tag = 'scoped memory for tpu_custom_call.1']
    #allocation7 [shape = 'u8[65536]{0}', space=vmem, size = 0x10000, scoped, tag = 'input window, operand 3, single buffered']
    #allocation8 [shape = 'u8[65536]{0}', space=vmem, size = 0x10000, scoped, tag = 'input window, operand 5, single buffered']
    #allocation9 [shape = 's32[1]{0}', space=sflag, size = 0x4, scoped, tag = 'scoped memory for tpu_custom_call.1']
    #allocation10 [shape = 'u8[4096]{0}', space=vmem, size = 0x1000, scoped, tag = 'output window, operand 0, single buffered']
    %12 = vsyncpa [#allocation3], 0
    %13 = vsyncpa [#allocation6], 0
    %14 = vsyncpa [#allocation9], 0
    %15 = vsyncpa [#allocation4], 0
    // Predicated region
    $region2: #{tpu_custom_call.1} parent=1 // pred_check
      _
    $region3: #{tpu_custom_call.1} parent=1 // pred_check_branch
      %17 = sbr.rel (0) target = $region5
    $region4: #{tpu_custom_call.1} parent=1 // pred_region
      %19 = vsyncadd [#allocation3], 0
      %s21 = sshll.u32 %s0, 4
      %s22 = int_to_ptr.hbm [resolvable:$true] %s21
      %s23 = sshll.u32 [#allocation2], 4
      %s24 = int_to_ptr.vmem [resolvable:$true] %s23
      %26 = dma.hbm_to_vmem [thread:$0]  %s22, 128, %s24, [#allocation3]
    $region5: #{tpu_custom_call.1} parent=1 // pred_fallthru
      _
    // Predicated region
    $region6: #{tpu_custom_call.1} parent=1 // pred_check
      _
    $region7: #{tpu_custom_call.1} parent=1 // pred_check_branch
      %28 = sbr.rel (0) target = $region9
    $region8: #{tpu_custom_call.1} parent=1 // pred_region
      %30 = vsyncadd [#allocation6], 0
      %s31 = sshll.u32 %s1, 4
      %s32 = int_to_ptr.hbm [resolvable:$true] %s31
      %s33 = sshll.u32 [#allocation5], 4
      %s34 = int_to_ptr.vmem [resolvable:$true] %s33
      %39 = dma.hbm_to_vmem [thread:$0]  %s32, 2048, %s34, [#allocation6], 128, 128, 8
    $region9: #{tpu_custom_call.1} parent=1 // pred_fallthru
      _
    // Predicated region
    $region10: #{tpu_custom_call.1} parent=1 // pred_check
      _
    $region11: #{tpu_custom_call.1} parent=1 // pred_check_branch
      %41 = sbr.rel (0) target = $region13
    $region12: #{tpu_custom_call.1} parent=1 // pred_region
      _
    $region13: #{tpu_custom_call.1} parent=1 // pred_fallthru
      _
    // Predicated region
    $region14: #{tpu_custom_call.1} parent=1 // pred_check
      _
    $region15: #{tpu_custom_call.1} parent=1 // pred_check_branch
      %43 = sbr.rel (0) target = $region17
    $region16: #{tpu_custom_call.1} parent=1 // pred_region
      %45 = vsyncadd [#allocation6], 0
      %s46 = sshll.u32 %s3, 4
      %s47 = int_to_ptr.hbm [resolvable:$true] %s46
      %s48 = sshll.u32 [#allocation7], 4
      %s49 = int_to_ptr.vmem [resolvable:$true] %s48
      %54 = dma.hbm_to_vmem [thread:$0]  %s47, 2048, %s49, [#allocation6], 128, 128, 8
    $region17: #{tpu_custom_call.1} parent=1 // pred_fallthru
      _
    // Predicated region
    $region18: #{tpu_custom_call.1} parent=1 // pred_check
      _
    $region19: #{tpu_custom_call.1} parent=1 // pred_check_branch
      %56 = sbr.rel (0) target = $region21
    $region20: #{tpu_custom_call.1} parent=1 // pred_region
      _
    $region21: #{tpu_custom_call.1} parent=1 // pred_fallthru
      _
    // Predicated region
    $region22: #{tpu_custom_call.1} parent=1 // pred_check
      _
    $region23: #{tpu_custom_call.1} parent=1 // pred_check_branch
      %58 = sbr.rel (0) target = $region25
    $region24: #{tpu_custom_call.1} parent=1 // pred_region
      %60 = vsyncadd [#allocation9], 0
      %s61 = sshll.u32 %s5, 4
      %s62 = int_to_ptr.hbm [resolvable:$true] %s61
      %s63 = sshll.u32 [#allocation8], 4
      %s64 = int_to_ptr.vmem [resolvable:$true] %s63
      %69 = dma.hbm_to_vmem [thread:$0]  %s62, 2048, %s64, [#allocation9], 128, 128, 8
    $region25: #{tpu_custom_call.1} parent=1 // pred_fallthru
      _
    // Predicated region
    $region26: #{tpu_custom_call.1} parent=1 // pred_check
      _
    $region27: #{tpu_custom_call.1} parent=1 // pred_check_branch
      %71 = sbr.rel (0) target = $region29
    $region28: #{tpu_custom_call.1} parent=1 // pred_region
      _
    $region29: #{tpu_custom_call.1} parent=1 // pred_fallthru
      _
    // Predicated region
    $region30: #{tpu_custom_call.1} parent=1 // pred_check
      _
    $region31: #{tpu_custom_call.1} parent=1 // pred_check_branch
      %73 = sbr.rel (0) target = $region33
    $region32: #{tpu_custom_call.1} parent=1 // pred_region
      %75 = dma.done [#allocation3], 128
    $region33: #{tpu_custom_call.1} parent=1 // pred_fallthru
      _
    // Predicated region
    $region34: #{tpu_custom_call.1} parent=1 // pred_check
      _
    $region35: #{tpu_custom_call.1} parent=1 // pred_check_branch
      %77 = sbr.rel (0) target = $region37
    $region36: #{tpu_custom_call.1} parent=1 // pred_region
      %79 = dma.done [#allocation6], 2048
    $region37: #{tpu_custom_call.1} parent=1 // pred_fallthru
      _
    // Predicated region
    $region38: #{tpu_custom_call.1} parent=1 // pred_check
      _
    $region39: #{tpu_custom_call.1} parent=1 // pred_check_branch
      %81 = sbr.rel (0) target = $region41
    $region40: #{tpu_custom_call.1} parent=1 // pred_region
      %83 = dma.done [#allocation6], 2048
    $region41: #{tpu_custom_call.1} parent=1 // pred_fallthru
      _
    // Predicated region
    $region42: #{tpu_custom_call.1} parent=1 // pred_check
      _
    $region43: #{tpu_custom_call.1} parent=1 // pred_check_branch
      %85 = sbr.rel (0) target = $region45
    $region44: #{tpu_custom_call.1} parent=1 // pred_region
      %87 = dma.done [#allocation9], 2048
    $region45: #{tpu_custom_call.1} parent=1 // pred_fallthru
      _
    %v88 = vld [vmem:[#allocation2] sm:$0xff]
    %v89 = vld [vmem:[#allocation5] sm:$0xff]
    %v90 = vld [vmem:[#allocation5 + $0x8] sm:$0xff]
    %v91 = vld [vmem:[#allocation5 + $0x10] sm:$0xff]
    %v92 = vld [vmem:[#allocation5 + $0x18] sm:$0xff]
    %v93 = vld [vmem:[#allocation5 + $0x20] sm:$0xff]
    %v94 = vld [vmem:[#allocation5 + $0x28] sm:$0xff]
    %v95 = vld [vmem:[#allocation5 + $0x30] sm:$0xff]
    %v96 = vld [vmem:[#allocation5 + $0x38] sm:$0xff]
    %v97 = vld [vmem:[#allocation5 + $0x40] sm:$0xff]
    %v98 = vld [vmem:[#allocation5 + $0x48] sm:$0xff]
    %v99 = vld [vmem:[#allocation5 + $0x50] sm:$0xff]
    %v100 = vld [vmem:[#allocation5 + $0x58] sm:$0xff]
    %v101 = vld [vmem:[#allocation5 + $0x60] sm:$0xff]
    %v102 = vld [vmem:[#allocation5 + $0x68] sm:$0xff]
    %v103 = vld [vmem:[#allocation5 + $0x70] sm:$0xff]
    %v104 = vld [vmem:[#allocation5 + $0x78] sm:$0xff]
    %v105 = vld [vmem:[%s2] sm:$0x1]
    %v107 = vperm.slane %v105, 0
    %109 = vmatpush.msra.mxu0 %v104
    %110 = vmatpush.msra.mxu0 %v103
    %111 = vmatpush.msra.mxu0 %v102
    %112 = vmatpush.msra.mxu0 %v101
    %113 = vmatpush.msra.mxu0 %v100
    %114 = vmatpush.msra.mxu0 %v99
    %115 = vmatpush.msra.mxu0 %v98
    %116 = vmatpush.msra.mxu0 %v97
    %117 = vmatpush.msra.mxu0 %v96
    %118 = vmatpush.msra.mxu0 %v95
    %119 = vmatpush.msra.mxu0 %v94
    %120 = vmatpush.msra.mxu0 %v93
    %121 = vmatpush.msra.mxu0 %v92
    %122 = vmatpush.msra.mxu0 %v91
    %123 = vmatpush.msra.mxu0 %v90
    %124 = vmatpush.msra.mxu0 %v89
    %125 = vmatmul.f32.gmra.mxu0 %v88
    %v126 = vpop.f32.mrf.mxu0
    %v127 = vadd.f32 %v107, %v126
    %128 = vdwg.mxu0
    %v129 = vmax.f32 %v127, 0.0
    %v130 = vld [vmem:[#allocation7] sm:$0xff]
    %v131 = vld [vmem:[#allocation7 + $0x8] sm:$0xff]
    %v132 = vld [vmem:[#allocation7 + $0x10] sm:$0xff]
    %v133 = vld [vmem:[#allocation7 + $0x18] sm:$0xff]
    %v134 = vld [vmem:[#allocation7 + $0x20] sm:$0xff]
    %v135 = vld [vmem:[#allocation7 + $0x28] sm:$0xff]
    %v136 = vld [vmem:[#allocation7 + $0x30] sm:$0xff]
    %v137 = vld [vmem:[#allocation7 + $0x38] sm:$0xff]
    %v138 = vld [vmem:[#allocation7 + $0x40] sm:$0xff]
    %v139 = vld [vmem:[#allocation7 + $0x48] sm:$0xff]
    %v140 = vld [vmem:[#allocation7 + $0x50] sm:$0xff]
    %v141 = vld [vmem:[#allocation7 + $0x58] sm:$0xff]
    %v142 = vld [vmem:[#allocation7 + $0x60] sm:$0xff]
    %v143 = vld [vmem:[#allocation7 + $0x68] sm:$0xff]
    %v144 = vld [vmem:[#allocation7 + $0x70] sm:$0xff]
    %v145 = vld [vmem:[#allocation7 + $0x78] sm:$0xff]
    %v146 = vld [vmem:[%s4] sm:$0x1]
    %v148 = vperm.slane %v146, 0
    %150 = vmatpush.msra.mxu0 %v145
    %151 = vmatpush.msra.mxu0 %v144
    %152 = vmatpush.msra.mxu0 %v143
    %153 = vmatpush.msra.mxu0 %v142
    %154 = vmatpush.msra.mxu0 %v141
    %155 = vmatpush.msra.mxu0 %v140
    %156 = vmatpush.msra.mxu0 %v139
    %157 = vmatpush.msra.mxu0 %v138
    %158 = vmatpush.msra.mxu0 %v137
    %159 = vmatpush.msra.mxu0 %v136
    %160 = vmatpush.msra.mxu0 %v135
    %161 = vmatpush.msra.mxu0 %v134
    %162 = vmatpush.msra.mxu0 %v133
    %163 = vmatpush.msra.mxu0 %v132
    %164 = vmatpush.msra.mxu0 %v131
    %165 = vmatpush.msra.mxu0 %v130
    %166 = vmatmul.f32.gmra.mxu0 %v129
    %v167 = vpop.f32.mrf.mxu0
    %v168 = vadd.f32 %v148, %v167
    %169 = vdwg.mxu0
    %v170 = vmax.f32 %v168, 0.0
    %v171 = vld [vmem:[#allocation8] sm:$0xff]
    %v172 = vld [vmem:[#allocation8 + $0x8] sm:$0xff]
    %v173 = vld [vmem:[#allocation8 + $0x10] sm:$0xff]
    %v174 = vld [vmem:[#allocation8 + $0x18] sm:$0xff]
    %v175 = vld [vmem:[#allocation8 + $0x20] sm:$0xff]
    %v176 = vld [vmem:[#allocation8 + $0x28] sm:$0xff]
    %v177 = vld [vmem:[#allocation8 + $0x30] sm:$0xff]
    %v178 = vld [vmem:[#allocation8 + $0x38] sm:$0xff]
    %v179 = vld [vmem:[#allocation8 + $0x40] sm:$0xff]
    %v180 = vld [vmem:[#allocation8 + $0x48] sm:$0xff]
    %v181 = vld [vmem:[#allocation8 + $0x50] sm:$0xff]
    %v182 = vld [vmem:[#allocation8 + $0x58] sm:$0xff]
    %v183 = vld [vmem:[#allocation8 + $0x60] sm:$0xff]
    %v184 = vld [vmem:[#allocation8 + $0x68] sm:$0xff]
    %v185 = vld [vmem:[#allocation8 + $0x70] sm:$0xff]
    %v186 = vld [vmem:[#allocation8 + $0x78] sm:$0xff]
    %v187 = vld [vmem:[%s6] sm:$0x1]
    %v189 = vperm.slane %v187, 0
    %191 = vmatpush.msra.mxu0 %v186
    %192 = vmatpush.msra.mxu0 %v185
    %193 = vmatpush.msra.mxu0 %v184
    %194 = vmatpush.msra.mxu0 %v183
    %195 = vmatpush.msra.mxu0 %v182
    %196 = vmatpush.msra.mxu0 %v181
    %197 = vmatpush.msra.mxu0 %v180
    %198 = vmatpush.msra.mxu0 %v179
    %199 = vmatpush.msra.mxu0 %v178
    %200 = vmatpush.msra.mxu0 %v177
    %201 = vmatpush.msra.mxu0 %v176
    %202 = vmatpush.msra.mxu0 %v175
    %203 = vmatpush.msra.mxu0 %v174
    %204 = vmatpush.msra.mxu0 %v173
    %205 = vmatpush.msra.mxu0 %v172
    %206 = vmatpush.msra.mxu0 %v171
    %207 = vmatmul.f32.gmra.mxu0 %v170
    %v208 = vpop.f32.mrf.mxu0
    %v209 = vadd.f32 %v189, %v208
    %210 = vdwg.mxu0
    %211 = vst [vmem:[#allocation10] sm:$0xff] %v209
    // Predicated region
    $region46: #{tpu_custom_call.1} parent=1 // pred_check
      _
    $region47: #{tpu_custom_call.1} parent=1 // pred_check_branch
      %213 = sbr.rel (0) target = $region49
    $region48: #{tpu_custom_call.1} parent=1 // pred_region
      %215 = vsyncadd [#allocation4], 0
      %s217 = sshll.u32 [#allocation10], 4
      %s218 = int_to_ptr.vmem [resolvable:$true] %s217
      %s219 = sshll.u32 %s7, 4
      %s220 = int_to_ptr.hbm [resolvable:$true] %s219
      %222 = dma.vmem_to_hbm [thread:$0]  %s218, 128, %s220, [#allocation4]
    $region49: #{tpu_custom_call.1} parent=1 // pred_fallthru
      _
    // Predicated region
    $region50: #{tpu_custom_call.1} parent=1 // pred_check
      _
    $region51: #{tpu_custom_call.1} parent=1 // pred_check_branch
      %224 = sbr.rel (0) target = $region53
    $region52: #{tpu_custom_call.1} parent=1 // pred_region
      %226 = dma.done [#allocation4], 128
    $region53: #{tpu_custom_call.1} parent=1 // pred_fallthru
      _
    %227 = vsyncpa [#allocation3], 1
    %228 = vsyncpa [#allocation6], 1
    %229 = vsyncpa [#allocation9], 1
    %230 = vsyncpa [#allocation4], 1

// kernel: tpu_custom_call.1
$region0: #{tpu_custom_call.1}
  #allocation0 [shape = 'u32[]', space=smem, size = 0x4, offset = 0x4, fixed_abs, tag = 'smem constant byte address 0x4 - core index']
  #allocation1 [shape = 'u32[72,128]{1,0:T(1,128)}', space=vmem, size = 0x9000, scoped, tag = 'internal scratch']
  %s0 = inlined_call_operand.hbm [shape: f32[8,128], index: 0, kind: input, shape index: {}]
  %s1 = inlined_call_operand.hbm [shape: f32[128,128], index: 1, kind: input, shape index: {}]
  %s2 = inlined_call_operand.vmem [shape: f32[1,128], index: 2, kind: input, shape index: {}]
  %s3 = inlined_call_operand.hbm [shape: f32[128,128], index: 3, kind: input, shape index: {}]
  %s4 = inlined_call_operand.vmem [shape: f32[1,128], index: 4, kind: input, shape index: {}]
  %s5 = inlined_call_operand.hbm [shape: f32[128,128], index: 5, kind: input, shape index: {}]
  %s6 = inlined_call_operand.vmem [shape: f32[1,128], index: 6, kind: input, shape index: {}]
  %s7 = inlined_call_operand.hbm [shape: f32[8,128], index: 7, kind: output, shape index: {}]
  %s8 = sld [smem:[#allocation0]]
  $region54: #{tpu_custom_call.1} parent=0
    _
  %s10 = ssub.s32 1, %s8
  %s11 = scalar_select 0, %s10, %s8
  $region1: #{tpu_custom_call.1} parent=0
    #allocation2 [shape = 'u8[4096]{0}', space=vmem, size = 0x1000, scoped, tag = 'input window, operand 0, single buffered']
    #allocation3 [shape = 's32[1]{0}', space=sflag, size = 0x4, scoped, tag = 'scoped memory for tpu_custom_call.1']
    #allocation4 [shape = 's32[1]{0}', space=sflag, size = 0x4, scoped, tag = 'scoped memory for tpu_custom_call.1']
    #allocation5 [shape = 'u8[65536]{0}', space=vmem, size = 0x10000, scoped, tag = 'input window, operand 1, single buffered']
    #allocation6 [shape = 's32[1]{0}', space=sflag, size = 0x4, scoped, tag = 'scoped memory for tpu_custom_call.1']
    #allocation7 [shape = 'u8[65536]{0}', space=vmem, size = 0x10000, scoped, tag = 'input window, operand 3, single buffered']
    #allocation8 [shape = 'u8[65536]{0}', space=vmem, size = 0x10000, scoped, tag = 'input window, operand 5, single buffered']
    #allocation9 [shape = 's32[1]{0}', space=sflag, size = 0x4, scoped, tag = 'scoped memory for tpu_custom_call.1']
    #allocation10 [shape = 'u8[4096]{0}', space=vmem, size = 0x1000, scoped, tag = 'output window, operand 0, single buffered']
    %12 = vsyncpa [#allocation3], 0
    %13 = vsyncpa [#allocation6], 0
    %14 = vsyncpa [#allocation9], 0
    %15 = vsyncpa [#allocation4], 0
    // Predicated region
    $region2: #{tpu_custom_call.1} parent=1 // pred_check
      _
    $region3: #{tpu_custom_call.1} parent=1 // pred_check_branch
      %17 = sbr.rel (0) target = $region5
    $region4: #{tpu_custom_call.1} parent=1 // pred_region
      %19 = vsyncadd [#allocation3], 0
      %s21 = sshll.u32 %s0, 4
      %s22 = int_to_ptr.hbm [resolvable:$true] %s21
      %s23 = sshll.u32 [#allocation2], 4
      %s24 = int_to_ptr.vmem [resolvable:$true] %s23
      %26 = dma.hbm_to_vmem [thread:$0]  %s22, 128, %s24, [#allocation3]
    $region5: #{tpu_custom_call.1} parent=1 // pred_fallthru
      _
    // Predicated region
    $region6: #{tpu_custom_call.1} parent=1 // pred_check
      _
    $region7: #{tpu_custom_call.1} parent=1 // pred_check_branch
      %28 = sbr.rel (0) target = $region9
    $region8: #{tpu_custom_call.1} parent=1 // pred_region
      %30 = vsyncadd [#allocation6], 0
      %s31 = sshll.u32 %s1, 4
      %s32 = int_to_ptr.hbm [resolvable:$true] %s31
      %s33 = sshll.u32 [#allocation5], 4
      %s34 = int_to_ptr.vmem [resolvable:$true] %s33
      %39 = dma.hbm_to_vmem [thread:$0]  %s32, 2048, %s34, [#allocation6], 128, 128, 8
    $region9: #{tpu_custom_call.1} parent=1 // pred_fallthru
      _
    // Predicated region
    $region10: #{tpu_custom_call.1} parent=1 // pred_check
      _
    $region11: #{tpu_custom_call.1} parent=1 // pred_check_branch
      %41 = sbr.rel (0) target = $region13
    $region12: #{tpu_custom_call.1} parent=1 // pred_region
      _
    $region13: #{tpu_custom_call.1} parent=1 // pred_fallthru
      _
    // Predicated region
    $region14: #{tpu_custom_call.1} parent=1 // pred_check
      _
    $region15: #{tpu_custom_call.1} parent=1 // pred_check_branch
      %43 = sbr.rel (0) target = $region17
    $region16: #{tpu_custom_call.1} parent=1 // pred_region
      %45 = vsyncadd [#allocation6], 0
      %s46 = sshll.u32 %s3, 4
      %s47 = int_to_ptr.hbm [resolvable:$true] %s46
      %s48 = sshll.u32 [#allocation7], 4
      %s49 = int_to_ptr.vmem [resolvable:$true] %s48
      %54 = dma.hbm_to_vmem [thread:$0]  %s47, 2048, %s49, [#allocation6], 128, 128, 8
    $region17: #{tpu_custom_call.1} parent=1 // pred_fallthru
      _
    // Predicated region
    $region18: #{tpu_custom_call.1} parent=1 // pred_check
      _
    $region19: #{tpu_custom_call.1} parent=1 // pred_check_branch
      %56 = sbr.rel (0) target = $region21
    $region20: #{tpu_custom_call.1} parent=1 // pred_region
      _
    $region21: #{tpu_custom_call.1} parent=1 // pred_fallthru
      _
    // Predicated region
    $region22: #{tpu_custom_call.1} parent=1 // pred_check
      _
    $region23: #{tpu_custom_call.1} parent=1 // pred_check_branch
      %58 = sbr.rel (0) target = $region25
    $region24: #{tpu_custom_call.1} parent=1 // pred_region
      %60 = vsyncadd [#allocation9], 0
      %s61 = sshll.u32 %s5, 4
      %s62 = int_to_ptr.hbm [resolvable:$true] %s61
      %s63 = sshll.u32 [#allocation8], 4
      %s64 = int_to_ptr.vmem [resolvable:$true] %s63
      %69 = dma.hbm_to_vmem [thread:$0]  %s62, 2048, %s64, [#allocation9], 128, 128, 8
    $region25: #{tpu_custom_call.1} parent=1 // pred_fallthru
      _
    // Predicated region
    $region26: #{tpu_custom_call.1} parent=1 // pred_check
      _
    $region27: #{tpu_custom_call.1} parent=1 // pred_check_branch
      %71 = sbr.rel (0) target = $region29
    $region28: #{tpu_custom_call.1} parent=1 // pred_region
      _
    $region29: #{tpu_custom_call.1} parent=1 // pred_fallthru
      _
    // Predicated region
    $region30: #{tpu_custom_call.1} parent=1 // pred_check
      _
    $region31: #{tpu_custom_call.1} parent=1 // pred_check_branch
      %73 = sbr.rel (0) target = $region33
    $region32: #{tpu_custom_call.1} parent=1 // pred_region
      %75 = dma.done [#allocation3], 128
    $region33: #{tpu_custom_call.1} parent=1 // pred_fallthru
      _
    // Predicated region
    $region34: #{tpu_custom_call.1} parent=1 // pred_check
      _
    $region35: #{tpu_custom_call.1} parent=1 // pred_check_branch
      %77 = sbr.rel (0) target = $region37
    $region36: #{tpu_custom_call.1} parent=1 // pred_region
      %79 = dma.done [#allocation6], 2048
    $region37: #{tpu_custom_call.1} parent=1 // pred_fallthru
      _
    // Predicated region
    $region38: #{tpu_custom_call.1} parent=1 // pred_check
      _
    $region39: #{tpu_custom_call.1} parent=1 // pred_check_branch
      %81 = sbr.rel (0) target = $region41
    $region40: #{tpu_custom_call.1} parent=1 // pred_region
      %83 = dma.done [#allocation6], 2048
    $region41: #{tpu_custom_call.1} parent=1 // pred_fallthru
      _
    // Predicated region
    $region42: #{tpu_custom_call.1} parent=1 // pred_check
      _
    $region43: #{tpu_custom_call.1} parent=1 // pred_check_branch
      %85 = sbr.rel (0) target = $region45
    $region44: #{tpu_custom_call.1} parent=1 // pred_region
      %87 = dma.done [#allocation9], 2048
    $region45: #{tpu_custom_call.1} parent=1 // pred_fallthru
      _
    %v88 = vld [vmem:[#allocation2] sm:$0xff]
    %v89 = vld [vmem:[#allocation5] sm:$0xff]
    %v90 = vld [vmem:[#allocation5 + $0x8] sm:$0xff]
    %v91 = vld [vmem:[#allocation5 + $0x10] sm:$0xff]
    %v92 = vld [vmem:[#allocation5 + $0x18] sm:$0xff]
    %v93 = vld [vmem:[#allocation5 + $0x20] sm:$0xff]
    %v94 = vld [vmem:[#allocation5 + $0x28] sm:$0xff]
    %v95 = vld [vmem:[#allocation5 + $0x30] sm:$0xff]
    %v96 = vld [vmem:[#allocation5 + $0x38] sm:$0xff]
    %v97 = vld [vmem:[#allocation5 + $0x40] sm:$0xff]
    %v98 = vld [vmem:[#allocation5 + $0x48] sm:$0xff]
    %v99 = vld [vmem:[#allocation5 + $0x50] sm:$0xff]
    %v100 = vld [vmem:[#allocation5 + $0x58] sm:$0xff]
    %v101 = vld [vmem:[#allocation5 + $0x60] sm:$0xff]
    %v102 = vld [vmem:[#allocation5 + $0x68] sm:$0xff]
    %v103 = vld [vmem:[#allocation5 + $0x70] sm:$0xff]
    %v104 = vld [vmem:[#allocation5 + $0x78] sm:$0xff]
    %v105 = vld [vmem:[%s2] sm:$0x1]
    %v107 = vperm.slane %v105, 0
    %109 = vmatpush.msra.mxu0 %v104
    %110 = vmatpush.msra.mxu0 %v103
    %111 = vmatpush.msra.mxu0 %v102
    %112 = vmatpush.msra.mxu0 %v101
    %113 = vmatpush.msra.mxu0 %v100
    %114 = vmatpush.msra.mxu0 %v99
    %115 = vmatpush.msra.mxu0 %v98
    %116 = vmatpush.msra.mxu0 %v97
    %117 = vmatpush.msra.mxu0 %v96
    %118 = vmatpush.msra.mxu0 %v95
    %119 = vmatpush.msra.mxu0 %v94
    %120 = vmatpush.msra.mxu0 %v93
    %121 = vmatpush.msra.mxu0 %v92
    %122 = vmatpush.msra.mxu0 %v91
    %123 = vmatpush.msra.mxu0 %v90
    %124 = vmatpush.msra.mxu0 %v89
    %125 = vmatmul.f32.gmra.mxu0 %v88
    %v126 = vpop.f32.mrf.mxu0
    %v127 = vadd.f32 %v107, %v126
    %128 = vdwg.mxu0
    %v129 = vmax.f32 %v127, 0.0
    %v130 = vld [vmem:[#allocation7] sm:$0xff]
    %v131 = vld [vmem:[#allocation7 + $0x8] sm:$0xff]
    %v132 = vld [vmem:[#allocation7 + $0x10] sm:$0xff]
    %v133 = vld [vmem:[#allocation7 + $0x18] sm:$0xff]
    %v134 = vld [vmem:[#allocation7 + $0x20] sm:$0xff]
    %v135 = vld [vmem:[#allocation7 + $0x28] sm:$0xff]
    %v136 = vld [vmem:[#allocation7 + $0x30] sm:$0xff]
    %v137 = vld [vmem:[#allocation7 + $0x38] sm:$0xff]
    %v138 = vld [vmem:[#allocation7 + $0x40] sm:$0xff]
    %v139 = vld [vmem:[#allocation7 + $0x48] sm:$0xff]
    %v140 = vld [vmem:[#allocation7 + $0x50] sm:$0xff]
    %v141 = vld [vmem:[#allocation7 + $0x58] sm:$0xff]
    %v142 = vld [vmem:[#allocation7 + $0x60] sm:$0xff]
    %v143 = vld [vmem:[#allocation7 + $0x68] sm:$0xff]
    %v144 = vld [vmem:[#allocation7 + $0x70] sm:$0xff]
    %v145 = vld [vmem:[#allocation7 + $0x78] sm:$0xff]
    %v146 = vld [vmem:[%s4] sm:$0x1]
    %v148 = vperm.slane %v146, 0
    %150 = vmatpush.msra.mxu0 %v145
    %151 = vmatpush.msra.mxu0 %v144
    %152 = vmatpush.msra.mxu0 %v143
    %153 = vmatpush.msra.mxu0 %v142
    %154 = vmatpush.msra.mxu0 %v141
    %155 = vmatpush.msra.mxu0 %v140
    %156 = vmatpush.msra.mxu0 %v139
    %157 = vmatpush.msra.mxu0 %v138
    %158 = vmatpush.msra.mxu0 %v137
    %159 = vmatpush.msra.mxu0 %v136
    %160 = vmatpush.msra.mxu0 %v135
    %161 = vmatpush.msra.mxu0 %v134
    %162 = vmatpush.msra.mxu0 %v133
    %163 = vmatpush.msra.mxu0 %v132
    %164 = vmatpush.msra.mxu0 %v131
    %165 = vmatpush.msra.mxu0 %v130
    %166 = vmatmul.f32.gmra.mxu0 %v129
    %v167 = vpop.f32.mrf.mxu0
    %v168 = vadd.f32 %v148, %v167
    %169 = vdwg.mxu0
    %v170 = vmax.f32 %v168, 0.0
    %v171 = vld [vmem:[#allocation8] sm:$0xff]
    %v172 = vld [vmem:[#allocation8 + $0x8] sm:$0xff]
    %v173 = vld [vmem:[#allocation8 + $0x10] sm:$0xff]
    %v174 = vld [vmem:[#allocation8 + $0x18] sm:$0xff]
    %v175 = vld [vmem:[#allocation8 + $0x20] sm:$0xff]
    %v176 = vld [vmem:[#allocation8 + $0x28] sm:$0xff]
    %v177 = vld [vmem:[#allocation8 + $0x30] sm:$0xff]
    %v178 = vld [vmem:[#allocation8 + $0x38] sm:$0xff]
    %v179 = vld [vmem:[#allocation8 + $0x40] sm:$0xff]
    %v180 = vld [vmem:[#allocation8 + $0x48] sm:$0xff]
    %v181 = vld [vmem:[#allocation8 + $0x50] sm:$0xff]
    %v182 = vld [vmem:[#allocation8 + $0x58] sm:$0xff]
    %v183 = vld [vmem:[#allocation8 + $0x60] sm:$0xff]
    %v184 = vld [vmem:[#allocation8 + $0x68] sm:$0xff]
    %v185 = vld [vmem:[#allocation8 + $0x70] sm:$0xff]
    %v186 = vld [vmem:[#allocation8 + $0x78] sm:$0xff]
    %v187 = vld [vmem:[%s6] sm:$0x1]
    %v189 = vperm.slane %v187, 0
    %191 = vmatpush.msra.mxu0 %v186
    %192 = vmatpush.msra.mxu0 %v185
    %193 = vmatpush.msra.mxu0 %v184
    %194 = vmatpush.msra.mxu0 %v183
    %195 = vmatpush.msra.mxu0 %v182
    %196 = vmatpush.msra.mxu0 %v181
    %197 = vmatpush.msra.mxu0 %v180
    %198 = vmatpush.msra.mxu0 %v179
    %199 = vmatpush.msra.mxu0 %v178
    %200 = vmatpush.msra.mxu0 %v177
    %201 = vmatpush.msra.mxu0 %v176
    %202 = vmatpush.msra.mxu0 %v175
    %203 = vmatpush.msra.mxu0 %v174
    %204 = vmatpush.msra.mxu0 %v173
    %205 = vmatpush.msra.mxu0 %v172
    %206 = vmatpush.msra.mxu0 %v171
    %207 = vmatmul.f32.gmra.mxu0 %v170
    %v208 = vpop.f32.mrf.mxu0
    %v209 = vadd.f32 %v189, %v208
    %210 = vdwg.mxu0
    %211 = vst [vmem:[#allocation10] sm:$0xff] %v209
    // Predicated region
    $region46: #{tpu_custom_call.1} parent=1 // pred_check
      _
    $region47: #{tpu_custom_call.1} parent=1 // pred_check_branch
      %213 = sbr.rel (0) target = $region49
    $region48: #{tpu_custom_call.1} parent=1 // pred_region
      %215 = vsyncadd [#allocation4], 0
      %s217 = sshll.u32 [#allocation10], 4
      %s218 = int_to_ptr.vmem [resolvable:$true] %s217
      %s219 = sshll.u32 %s7, 4
      %s220 = int_to_ptr.hbm [resolvable:$true] %s219
      %222 = dma.vmem_to_hbm [thread:$0]  %s218, 128, %s220, [#allocation4]
    $region49: #{tpu_custom_call.1} parent=1 // pred_fallthru
      _
    // Predicated region
    $region50: #{tpu_custom_call.1} parent=1 // pred_check
      _
    $region51: #{tpu_custom_call.1} parent=1 // pred_check_branch
      %224 = sbr.rel (0) target = $region53
    $region52: #{tpu_custom_call.1} parent=1 // pred_region
      %226 = dma.done [#allocation4], 128
    $region53: #{tpu_custom_call.1} parent=1 // pred_fallthru
      _
    %227 = vsyncpa [#allocation3], 1
    %228 = vsyncpa [#allocation6], 1
    %229 = vsyncpa [#allocation9], 1
    %230 = vsyncpa [#allocation4], 1

</llo_original>
